<compile_context>
chip_gen: v5e
topology: v5e:2x2
jax: 0.10.0
libtpu: 0.0.40
codegen_flags: <defaults>
</compile_context>

<pallas_src>
import jax
import jax.numpy as jnp
from jax.experimental import pallas as pl
from jax.experimental.pallas import tpu as pltpu

EPS = 1e-5
NEG_SLOPE = 0.1
HID = 128

# Row layout of the packed (16, HID) per-feature-vector slab.
_B1, _G1, _BT1 = 0, 1, 2
_B2, _G2, _BT2 = 3, 4, 5
_B3, _G3, _BT3 = 6, 7, 8
_W4, _B4 = 9, 10
_VEC_ROWS = 16  # padded to a multiple of 8 sublanes


def lwd_kernel(x_ref, w1_ref, w23_ref, vec_ref, o_ref):
    B = x_ref.shape[0]
    inv_b = jnp.float32(1.0 / B)

    def vrow(r):
        # Static slice of the packed vector slab -> (1, HID).
        return vec_ref[r:r + 1, :]

    def block(h, w, b_row, g_row, bt_row):
        # Linear
        h = jnp.dot(h, w, preferred_element_type=jnp.float32) + vrow(b_row)
        # One-pass train-mode BatchNorm1d over the batch axis:
        # the two reductions are independent so they can overlap on the XLU.
        s = jnp.sum(h, axis=0, keepdims=True)
        ss = jnp.sum(h * h, axis=0, keepdims=True)
        mu = s * inv_b
        var = ss * inv_b - mu * mu          # biased variance, == mean((h-mu)^2)
        h = (h - mu) * jax.lax.rsqrt(var + EPS)
        h = h * vrow(g_row) + vrow(bt_row)
        # LeakyReLU(0.1)
        return jnp.where(h > 0, h, NEG_SLOPE * h)

    h = x_ref[...].astype(jnp.float32)
    h = block(h, w1_ref[...], _B1, _G1, _BT1)
    h = block(h, w23_ref[0:HID, :], _B2, _G2, _BT2)
    h = block(h, w23_ref[HID:2 * HID, :], _B3, _G3, _BT3)

    # Final Linear(128 -> 1): VPU multiply + lane reduction instead of an N=1
    # MXU matmul whose 128-wide result would be 127/128 padding.
    w4_row = vrow(_W4)                       # (1, HID)
    b4 = vec_ref[_B4:_B4 + 1, 0:1]           # (1, 1)
    o_ref[...] = jnp.sum(h * w4_row, axis=-1, keepdims=True) + b4


def lwd_forward(x, packed):
    """x: [B, dim_z] float32, packed = (w1, w23, vec_slab) -> [B, 1] float32."""
    w1, w23, vec = packed
    B = x.shape[0]
    vspec = pl.BlockSpec(memory_space=pltpu.MemorySpace.VMEM)
    return pl.pallas_call(
        lwd_kernel,
        out_shape=jax.ShapeDtypeStruct((B, 1), jnp.float32),
        in_specs=[vspec, vspec, vspec, vspec],
        out_specs=vspec,
        compiler_params=pltpu.CompilerParams(vmem_limit_bytes=16 * 1024 * 1024),
    )(x, w1, w23, vec)


def pack_params(params):
    """Pack the 14 logical parameters into 3 DMA-friendly slabs."""
    (w1, b1, g1, bt1, w2, b2, g2, bt2, w3, b3, g3, bt3, w4, b4) = params
    w23 = jnp.concatenate([w2, w3], axis=0)                      # (2*HID, HID)
    b4_row = jnp.zeros((1, HID), jnp.float32).at[0, 0].set(b4[0, 0])
    rows = jnp.concatenate(
        [b1, g1, bt1, b2, g2, bt2, b3, g3, bt3, w4.T, b4_row], axis=0)
    pad = jnp.zeros((_VEC_ROWS - rows.shape[0], HID), jnp.float32)
    vec = jnp.concatenate([rows, pad], axis=0)                   # (16, HID)
    return w1, w23, vec


def init_params(key, dim_z):
    """Deterministic synthetic parameters (PyTorch-like fan-in scaling)."""
    keys = jax.random.split(key, 8)

    def linear(kw, kb, fan_in, fan_out):
        lim = 1.0 / jnp.sqrt(jnp.float32(fan_in))
        w = jax.random.uniform(kw, (fan_in, fan_out), jnp.float32, -lim, lim)
        b = jax.random.uniform(kb, (1, fan_out), jnp.float32, -lim, lim)
        return w, b

    w1, b1 = linear(keys[0], keys[1], dim_z, HID)
    w2, b2 = linear(keys[2], keys[3], HID, HID)
    w3, b3 = linear(keys[4], keys[5], HID, HID)
    w4, b4 = linear(keys[6], keys[7], HID, 1)

    # BatchNorm1d affine params: default init weight=1, bias=0
    g = jnp.ones((1, HID), jnp.float32)
    bt = jnp.zeros((1, HID), jnp.float32)

    return (w1, b1, g, bt,
            w2, b2, g, bt,
            w3, b3, g, bt,
            w4, b4)


def reference_forward(x, params):
    """Pure-JAX reference mirroring the PyTorch forward (train-mode BN)."""
    (w1, b1, g1, bt1, w2, b2, g2, bt2, w3, b3, g3, bt3, w4, b4) = params

    def block(h, w, b, g, bt):
        h = h @ w + b
        mu = jnp.mean(h, axis=0, keepdims=True)
        var = jnp.mean((h - mu) ** 2, axis=0, keepdims=True)
        h = (h - mu) / jnp.sqrt(var + EPS) * g + bt
        return jnp.where(h > 0, h, NEG_SLOPE * h)

    h = block(x, w1, b1, g1, bt1)
    h = block(h, w2, b2, g2, bt2)
    h = block(h, w3, b3, g3, bt3)
    return h @ w4 + b4


if __name__ == "__main__":
    dim_z = 32
    B = 8

    key = jax.random.PRNGKey(0)
    kx, kp = jax.random.split(key)
    x = jax.random.normal(kx, (B, dim_z), jnp.float32)
    params = init_params(kp, dim_z)
    packed = pack_params(params)

    out = lwd_forward(x, packed)
    out = jax.block_until_ready(out)

    ref = reference_forward(x, params)
    assert out.shape == (B, 1), out.shape
    assert jnp.allclose(out, ref, atol=1e-4, rtol=1e-4), (out, ref)

    print("KERNEL_OK")
</pallas_src>

<mosaic_0001>
module attributes {stable_mosaic.version = 11 : i64} {
  func.func @lwd_kernel(%arg0: memref<8x32xf32, #tpu.memory_space<vmem>>, %arg1: memref<32x128xf32, #tpu.memory_space<vmem>>, %arg2: memref<256x128xf32, #tpu.memory_space<vmem>>, %arg3: memref<16x128xf32, #tpu.memory_space<vmem>>, %arg4: memref<8x1xf32, #tpu.memory_space<vmem>>) attributes {dimension_semantics = [], scalar_prefetch = 0 : i64, scratch_operands = 0 : i64, tpu.core_type = #tpu.core_type<tc>} {
    %c0 = arith.constant 0 : index
    %c0_0 = arith.constant 0 : index
    %0 = vector.load %arg0[%c0, %c0_0] : memref<8x32xf32, #tpu.memory_space<vmem>>, vector<8x32xf32>
    %c0_1 = arith.constant 0 : index
    %c0_2 = arith.constant 0 : index
    %1 = vector.load %arg1[%c0_1, %c0_2] : memref<32x128xf32, #tpu.memory_space<vmem>>, vector<32x128xf32>
    %cst = arith.constant dense<0.000000e+00> : vector<8x128xf32>
    %2 = tpu.matmul %0, %1, %cst {dimension_numbers = #tpu.dot_dimension_numbers<[1], [0], [0], [1], [0, 0, 1, 1], [], []>} : vector<8x32xf32>, vector<32x128xf32>, vector<8x128xf32> -> vector<8x128xf32>
    %c0_3 = arith.constant 0 : index
    %c0_4 = arith.constant 0 : index
    %3 = vector.load %arg3[%c0_3, %c0_4] : memref<16x128xf32, #tpu.memory_space<vmem>>, vector<1x128xf32>
    %4 = vector.broadcast %3 : vector<1x128xf32> to vector<8x128xf32>
    %5 = arith.addf %2, %4 : vector<8x128xf32>
    %cst_5 = arith.constant dense<0.000000e+00> : vector<128xf32>
    %6 = vector.multi_reduction <add>, %5, %cst_5 [0] : vector<8x128xf32> to vector<128xf32>
    %7 = vector.shape_cast %6 : vector<128xf32> to vector<1x128xf32>
    %8 = arith.mulf %5, %5 : vector<8x128xf32>
    %cst_6 = arith.constant dense<0.000000e+00> : vector<128xf32>
    %9 = vector.multi_reduction <add>, %8, %cst_6 [0] : vector<8x128xf32> to vector<128xf32>
    %10 = vector.shape_cast %9 : vector<128xf32> to vector<1x128xf32>
    %cst_7 = arith.constant 1.250000e-01 : f32
    %11 = vector.broadcast %cst_7 : f32 to vector<1x128xf32>
    %12 = arith.mulf %7, %11 : vector<1x128xf32>
    %cst_8 = arith.constant 1.250000e-01 : f32
    %13 = vector.broadcast %cst_8 : f32 to vector<1x128xf32>
    %14 = arith.mulf %10, %13 : vector<1x128xf32>
    %15 = arith.mulf %12, %12 : vector<1x128xf32>
    %16 = arith.subf %14, %15 : vector<1x128xf32>
    %17 = vector.broadcast %12 : vector<1x128xf32> to vector<8x128xf32>
    %18 = arith.subf %5, %17 : vector<8x128xf32>
    %cst_9 = arith.constant 9.99999974E-6 : f32
    %19 = vector.broadcast %cst_9 : f32 to vector<1x128xf32>
    %20 = arith.addf %16, %19 : vector<1x128xf32>
    %21 = math.rsqrt %20 : vector<1x128xf32>
    %22 = vector.broadcast %21 : vector<1x128xf32> to vector<8x128xf32>
    %23 = arith.mulf %18, %22 : vector<8x128xf32>
    %c1 = arith.constant 1 : index
    %c0_10 = arith.constant 0 : index
    %24 = vector.load %arg3[%c1, %c0_10] : memref<16x128xf32, #tpu.memory_space<vmem>>, vector<1x128xf32>
    %25 = vector.broadcast %24 : vector<1x128xf32> to vector<8x128xf32>
    %26 = arith.mulf %23, %25 : vector<8x128xf32>
    %c2 = arith.constant 2 : index
    %c0_11 = arith.constant 0 : index
    %27 = vector.load %arg3[%c2, %c0_11] : memref<16x128xf32, #tpu.memory_space<vmem>>, vector<1x128xf32>
    %28 = vector.broadcast %27 : vector<1x128xf32> to vector<8x128xf32>
    %29 = arith.addf %26, %28 : vector<8x128xf32>
    %cst_12 = arith.constant 0.000000e+00 : f32
    %30 = vector.broadcast %cst_12 : f32 to vector<8x128xf32>
    %31 = arith.cmpf ogt, %29, %30 : vector<8x128xf32>
    %cst_13 = arith.constant 1.000000e-01 : f32
    %32 = vector.broadcast %cst_13 : f32 to vector<8x128xf32>
    %33 = arith.mulf %32, %29 : vector<8x128xf32>
    %34 = arith.select %31, %29, %33 : vector<8x128xi1>, vector<8x128xf32>
    %c0_14 = arith.constant 0 : index
    %c0_15 = arith.constant 0 : index
    %35 = vector.load %arg2[%c0_14, %c0_15] : memref<256x128xf32, #tpu.memory_space<vmem>>, vector<128x128xf32>
    %cst_16 = arith.constant dense<0.000000e+00> : vector<8x128xf32>
    %36 = tpu.matmul %34, %35, %cst_16 {dimension_numbers = #tpu.dot_dimension_numbers<[1], [0], [0], [1], [0, 0, 1, 1], [], []>} : vector<8x128xf32>, vector<128x128xf32>, vector<8x128xf32> -> vector<8x128xf32>
    %c3 = arith.constant 3 : index
    %c0_17 = arith.constant 0 : index
    %37 = vector.load %arg3[%c3, %c0_17] : memref<16x128xf32, #tpu.memory_space<vmem>>, vector<1x128xf32>
    %38 = vector.broadcast %37 : vector<1x128xf32> to vector<8x128xf32>
    %39 = arith.addf %36, %38 : vector<8x128xf32>
    %cst_18 = arith.constant dense<0.000000e+00> : vector<128xf32>
    %40 = vector.multi_reduction <add>, %39, %cst_18 [0] : vector<8x128xf32> to vector<128xf32>
    %41 = vector.shape_cast %40 : vector<128xf32> to vector<1x128xf32>
    %42 = arith.mulf %39, %39 : vector<8x128xf32>
    %cst_19 = arith.constant dense<0.000000e+00> : vector<128xf32>
    %43 = vector.multi_reduction <add>, %42, %cst_19 [0] : vector<8x128xf32> to vector<128xf32>
    %44 = vector.shape_cast %43 : vector<128xf32> to vector<1x128xf32>
    %cst_20 = arith.constant 1.250000e-01 : f32
    %45 = vector.broadcast %cst_20 : f32 to vector<1x128xf32>
    %46 = arith.mulf %41, %45 : vector<1x128xf32>
    %cst_21 = arith.constant 1.250000e-01 : f32
    %47 = vector.broadcast %cst_21 : f32 to vector<1x128xf32>
    %48 = arith.mulf %44, %47 : vector<1x128xf32>
    %49 = arith.mulf %46, %46 : vector<1x128xf32>
    %50 = arith.subf %48, %49 : vector<1x128xf32>
    %51 = vector.broadcast %46 : vector<1x128xf32> to vector<8x128xf32>
    %52 = arith.subf %39, %51 : vector<8x128xf32>
    %cst_22 = arith.constant 9.99999974E-6 : f32
    %53 = vector.broadcast %cst_22 : f32 to vector<1x128xf32>
    %54 = arith.addf %50, %53 : vector<1x128xf32>
    %55 = math.rsqrt %54 : vector<1x128xf32>
    %56 = vector.broadcast %55 : vector<1x128xf32> to vector<8x128xf32>
    %57 = arith.mulf %52, %56 : vector<8x128xf32>
    %c4 = arith.constant 4 : index
    %c0_23 = arith.constant 0 : index
    %58 = vector.load %arg3[%c4, %c0_23] : memref<16x128xf32, #tpu.memory_space<vmem>>, vector<1x128xf32>
    %59 = vector.broadcast %58 : vector<1x128xf32> to vector<8x128xf32>
    %60 = arith.mulf %57, %59 : vector<8x128xf32>
    %c5 = arith.constant 5 : index
    %c0_24 = arith.constant 0 : index
    %61 = vector.load %arg3[%c5, %c0_24] : memref<16x128xf32, #tpu.memory_space<vmem>>, vector<1x128xf32>
    %62 = vector.broadcast %61 : vector<1x128xf32> to vector<8x128xf32>
    %63 = arith.addf %60, %62 : vector<8x128xf32>
    %cst_25 = arith.constant 0.000000e+00 : f32
    %64 = vector.broadcast %cst_25 : f32 to vector<8x128xf32>
    %65 = arith.cmpf ogt, %63, %64 : vector<8x128xf32>
    %cst_26 = arith.constant 1.000000e-01 : f32
    %66 = vector.broadcast %cst_26 : f32 to vector<8x128xf32>
    %67 = arith.mulf %66, %63 : vector<8x128xf32>
    %68 = arith.select %65, %63, %67 : vector<8x128xi1>, vector<8x128xf32>
    %c128 = arith.constant 128 : index
    %c0_27 = arith.constant 0 : index
    %69 = vector.load %arg2[%c128, %c0_27] : memref<256x128xf32, #tpu.memory_space<vmem>>, vector<128x128xf32>
    %cst_28 = arith.constant dense<0.000000e+00> : vector<8x128xf32>
    %70 = tpu.matmul %68, %69, %cst_28 {dimension_numbers = #tpu.dot_dimension_numbers<[1], [0], [0], [1], [0, 0, 1, 1], [], []>} : vector<8x128xf32>, vector<128x128xf32>, vector<8x128xf32> -> vector<8x128xf32>
    %c6 = arith.constant 6 : index
    %c0_29 = arith.constant 0 : index
    %71 = vector.load %arg3[%c6, %c0_29] : memref<16x128xf32, #tpu.memory_space<vmem>>, vector<1x128xf32>
    %72 = vector.broadcast %71 : vector<1x128xf32> to vector<8x128xf32>
    %73 = arith.addf %70, %72 : vector<8x128xf32>
    %cst_30 = arith.constant dense<0.000000e+00> : vector<128xf32>
    %74 = vector.multi_reduction <add>, %73, %cst_30 [0] : vector<8x128xf32> to vector<128xf32>
    %75 = vector.shape_cast %74 : vector<128xf32> to vector<1x128xf32>
    %76 = arith.mulf %73, %73 : vector<8x128xf32>
    %cst_31 = arith.constant dense<0.000000e+00> : vector<128xf32>
    %77 = vector.multi_reduction <add>, %76, %cst_31 [0] : vector<8x128xf32> to vector<128xf32>
    %78 = vector.shape_cast %77 : vector<128xf32> to vector<1x128xf32>
    %cst_32 = arith.constant 1.250000e-01 : f32
    %79 = vector.broadcast %cst_32 : f32 to vector<1x128xf32>
    %80 = arith.mulf %75, %79 : vector<1x128xf32>
    %cst_33 = arith.constant 1.250000e-01 : f32
    %81 = vector.broadcast %cst_33 : f32 to vector<1x128xf32>
    %82 = arith.mulf %78, %81 : vector<1x128xf32>
    %83 = arith.mulf %80, %80 : vector<1x128xf32>
    %84 = arith.subf %82, %83 : vector<1x128xf32>
    %85 = vector.broadcast %80 : vector<1x128xf32> to vector<8x128xf32>
    %86 = arith.subf %73, %85 : vector<8x128xf32>
    %cst_34 = arith.constant 9.99999974E-6 : f32
    %87 = vector.broadcast %cst_34 : f32 to vector<1x128xf32>
    %88 = arith.addf %84, %87 : vector<1x128xf32>
    %89 = math.rsqrt %88 : vector<1x128xf32>
    %90 = vector.broadcast %89 : vector<1x128xf32> to vector<8x128xf32>
    %91 = arith.mulf %86, %90 : vector<8x128xf32>
    %c7 = arith.constant 7 : index
    %c0_35 = arith.constant 0 : index
    %92 = vector.load %arg3[%c7, %c0_35] : memref<16x128xf32, #tpu.memory_space<vmem>>, vector<1x128xf32>
    %93 = vector.broadcast %92 : vector<1x128xf32> to vector<8x128xf32>
    %94 = arith.mulf %91, %93 : vector<8x128xf32>
    %c8 = arith.constant 8 : index
    %c0_36 = arith.constant 0 : index
    %95 = vector.load %arg3[%c8, %c0_36] : memref<16x128xf32, #tpu.memory_space<vmem>>, vector<1x128xf32>
    %96 = vector.broadcast %95 : vector<1x128xf32> to vector<8x128xf32>
    %97 = arith.addf %94, %96 : vector<8x128xf32>
    %cst_37 = arith.constant 0.000000e+00 : f32
    %98 = vector.broadcast %cst_37 : f32 to vector<8x128xf32>
    %99 = arith.cmpf ogt, %97, %98 : vector<8x128xf32>
    %cst_38 = arith.constant 1.000000e-01 : f32
    %100 = vector.broadcast %cst_38 : f32 to vector<8x128xf32>
    %101 = arith.mulf %100, %97 : vector<8x128xf32>
    %102 = arith.select %99, %97, %101 : vector<8x128xi1>, vector<8x128xf32>
    %c9 = arith.constant 9 : index
    %c0_39 = arith.constant 0 : index
    %103 = vector.load %arg3[%c9, %c0_39] : memref<16x128xf32, #tpu.memory_space<vmem>>, vector<1x128xf32>
    %c10 = arith.constant 10 : index
    %c0_40 = arith.constant 0 : index
    %104 = vector.load %arg3[%c10, %c0_40] : memref<16x128xf32, #tpu.memory_space<vmem>>, vector<1x1xf32>
    %105 = vector.broadcast %103 : vector<1x128xf32> to vector<8x128xf32>
    %106 = arith.mulf %102, %105 : vector<8x128xf32>
    %cst_41 = arith.constant dense<0.000000e+00> : vector<8xf32>
    %107 = vector.multi_reduction <add>, %106, %cst_41 [1] : vector<8x128xf32> to vector<8xf32>
    %108 = vector.shape_cast %107 : vector<8xf32> to vector<8x1xf32>
    %109 = vector.broadcast %104 : vector<1x1xf32> to vector<8x1xf32>
    %110 = arith.addf %108, %109 : vector<8x1xf32>
    %c0_42 = arith.constant 0 : index
    %c0_43 = arith.constant 0 : index
    %111 = vector.load %arg4[%c0_42, %c0_43] : memref<8x1xf32, #tpu.memory_space<vmem>>, vector<8x1xf32>
    tpu.vector_store %arg4[%c0_42, %c0_43], %110 {strides = array<i32>} : memref<8x1xf32, #tpu.memory_space<vmem>>, vector<8x1xf32>,
    return
  }
}

</mosaic_0001>

<llo_original>
// kernel: tpu_custom_call.1
$region0: #{tpu_custom_call.1}
  #allocation0 [shape = 'u32[]', space=smem, size = 0x4, offset = 0x4, fixed_abs, tag = 'smem constant byte address 0x4 - core index']
  #allocation1 [shape = 'u32[72,128]{1,0:T(1,128)}', space=vmem, size = 0x9000, scoped, tag = 'internal scratch']
  %s0 = inlined_call_operand.hbm [shape: f32[8,32], index: 0, kind: input, shape index: {}]
  %s1 = inlined_call_operand.hbm [shape: f32[32,128], index: 1, kind: input, shape index: {}]
  %s2 = inlined_call_operand.hbm [shape: f32[256,128], index: 2, kind: input, shape index: {}]
  %s3 = inlined_call_operand.hbm [shape: f32[16,128], index: 3, kind: input, shape index: {}]
  %s4 = inlined_call_operand.vmem [shape: f32[8,1], index: 4, kind: output, shape index: {}]
  %s5 = sld [smem:[#allocation0]]
  $region42: #{tpu_custom_call.1} parent=0
    _
  %s7 = ssub.s32 1, %s5
  %s8 = scalar_select 0, %s7, %s5
  $region1: #{tpu_custom_call.1} parent=0
    #allocation2 [shape = 'u8[4096]{0}', space=vmem, size = 0x1000, scoped, tag = 'input window, operand 0, single buffered']
    #allocation3 [shape = 's32[1]{0}', space=sflag, size = 0x4, scoped, tag = 'scoped memory for tpu_custom_call.1']
    #allocation4 [shape = 'u8[16384]{0}', space=vmem, size = 0x4000, scoped, tag = 'input window, operand 1, single buffered']
    #allocation5 [shape = 's32[1]{0}', space=sflag, size = 0x4, scoped, tag = 'scoped memory for tpu_custom_call.1']
    #allocation6 [shape = 'u8[131072]{0}', space=vmem, size = 0x20000, scoped, tag = 'input window, operand 2, single buffered']
    #allocation7 [shape = 'u8[8192]{0}', space=vmem, size = 0x2000, scoped, tag = 'input window, operand 3, single buffered']
    #allocation8 [shape = 's32[1]{0}', space=sflag, size = 0x4, scoped, tag = 'scoped memory for tpu_custom_call.1']
    %9 = vsyncpa [#allocation3], 0
    %10 = vsyncpa [#allocation5], 0
    %11 = vsyncpa [#allocation8], 0
    // Predicated region
    $region2: #{tpu_custom_call.1} parent=1 // pred_check
      _
    $region3: #{tpu_custom_call.1} parent=1 // pred_check_branch
      %13 = sbr.rel (0) target = $region5
    $region4: #{tpu_custom_call.1} parent=1 // pred_region
      %15 = vsyncadd [#allocation3], 0
      %s17 = sshll.u32 %s0, 4
      %s18 = int_to_ptr.hbm [resolvable:$true] %s17
      %s19 = sshll.u32 [#allocation2], 4
      %s20 = int_to_ptr.vmem [resolvable:$true] %s19
      %22 = dma.hbm_to_vmem [thread:$0]  %s18, 128, %s20, [#allocation3]
    $region5: #{tpu_custom_call.1} parent=1 // pred_fallthru
      _
    // Predicated region
    $region6: #{tpu_custom_call.1} parent=1 // pred_check
      _
    $region7: #{tpu_custom_call.1} parent=1 // pred_check_branch
      %24 = sbr.rel (0) target = $region9
    $region8: #{tpu_custom_call.1} parent=1 // pred_region
      %26 = vsyncadd [#allocation5], 0
      %s27 = sshll.u32 %s1, 4
      %s28 = int_to_ptr.hbm [resolvable:$true] %s27
      %s29 = sshll.u32 [#allocation4], 4
      %s30 = int_to_ptr.vmem [resolvable:$true] %s29
      %35 = dma.hbm_to_vmem [thread:$0]  %s28, 512, %s30, [#allocation5], 128, 128, 8
    $region9: #{tpu_custom_call.1} parent=1 // pred_fallthru
      _
    // Predicated region
    $region10: #{tpu_custom_call.1} parent=1 // pred_check
      _
    $region11: #{tpu_custom_call.1} parent=1 // pred_check_branch
      %37 = sbr.rel (0) target = $region13
    $region12: #{tpu_custom_call.1} parent=1 // pred_region
      %39 = vsyncadd [#allocation5], 0
      %s40 = sshll.u32 %s2, 4
      %s41 = int_to_ptr.hbm [resolvable:$true] %s40
      %s42 = sshll.u32 [#allocation6], 4
      %s43 = int_to_ptr.vmem [resolvable:$true] %s42
      %48 = dma.hbm_to_vmem [thread:$0]  %s41, 4096, %s43, [#allocation5], 128, 128, 8
    $region13: #{tpu_custom_call.1} parent=1 // pred_fallthru
      _
    // Predicated region
    $region14: #{tpu_custom_call.1} parent=1 // pred_check
      _
    $region15: #{tpu_custom_call.1} parent=1 // pred_check_branch
      %50 = sbr.rel (0) target = $region17
    $region16: #{tpu_custom_call.1} parent=1 // pred_region
      %52 = vsyncadd [#allocation8], 0
      %s53 = sshll.u32 %s3, 4
      %s54 = int_to_ptr.hbm [resolvable:$true] %s53
      %s55 = sshll.u32 [#allocation7], 4
      %s56 = int_to_ptr.vmem [resolvable:$true] %s55
      %61 = dma.hbm_to_vmem [thread:$0]  %s54, 256, %s56, [#allocation8], 128, 128, 8
    $region17: #{tpu_custom_call.1} parent=1 // pred_fallthru
      _
    // Predicated region
    $region18: #{tpu_custom_call.1} parent=1 // pred_check
      _
    $region19: #{tpu_custom_call.1} parent=1 // pred_check_branch
      %63 = sbr.rel (0) target = $region21
    $region20: #{tpu_custom_call.1} parent=1 // pred_region
      %65 = dma.done [#allocation3], 128
    $region21: #{tpu_custom_call.1} parent=1 // pred_fallthru
      _
    // Predicated region
    $region22: #{tpu_custom_call.1} parent=1 // pred_check
      _
    $region23: #{tpu_custom_call.1} parent=1 // pred_check_branch
      %67 = sbr.rel (0) target = $region25
    $region24: #{tpu_custom_call.1} parent=1 // pred_region
      %69 = dma.done [#allocation5], 512
    $region25: #{tpu_custom_call.1} parent=1 // pred_fallthru
      _
    // Predicated region
    $region26: #{tpu_custom_call.1} parent=1 // pred_check
      _
    $region27: #{tpu_custom_call.1} parent=1 // pred_check_branch
      %71 = sbr.rel (0) target = $region29
    $region28: #{tpu_custom_call.1} parent=1 // pred_region
      %73 = dma.done [#allocation5], 4096
    $region29: #{tpu_custom_call.1} parent=1 // pred_fallthru
      _
    // Predicated region
    $region30: #{tpu_custom_call.1} parent=1 // pred_check
      _
    $region31: #{tpu_custom_call.1} parent=1 // pred_check_branch
      %75 = sbr.rel (0) target = $region33
    $region32: #{tpu_custom_call.1} parent=1 // pred_region
      %77 = dma.done [#allocation8], 256
    $region33: #{tpu_custom_call.1} parent=1 // pred_fallthru
      _
    %v78 = vld [vmem:[#allocation2] sm:$0xff]
    %v79 = vld [vmem:[#allocation4] sm:$0xff]
    %v80 = vld [vmem:[#allocation4 + $0x8] sm:$0xff]
    %v81 = vld [vmem:[#allocation4 + $0x10] sm:$0xff]
    %v82 = vld [vmem:[#allocation4 + $0x18] sm:$0xff]
    %v83 = vld [vmem:[#allocation7] sm:$0x1]
    %v84 = vperm.slane %v83, 0
    %vm85 = vcmask 261120
    %v87 = vsel %vm85, %v78, 0
    %89 = vmatpush.msra.mxu0 0.0
    %90 = vmatpush.msra.mxu0 0.0
    %91 = vmatpush.msra.mxu0 0.0
    %92 = vmatpush.msra.mxu0 0.0
    %93 = vmatpush.msra.mxu0 0.0
    %94 = vmatpush.msra.mxu0 0.0
    %95 = vmatpush.msra.mxu0 0.0
    %96 = vmatpush.msra.mxu0 0.0
    %97 = vmatpush.msra.mxu0 0.0
    %98 = vmatpush.msra.mxu0 0.0
    %99 = vmatpush.msra.mxu0 0.0
    %100 = vmatpush.msra.mxu0 0.0
    %101 = vmatpush.msra.mxu0 %v82
    %102 = vmatpush.msra.mxu0 %v81
    %103 = vmatpush.msra.mxu0 %v80
    %104 = vmatpush.msra.mxu0 %v79
    %105 = vmatmul.f32.gmra.mxu0 %v87
    %v106 = vpop.f32.mrf.mxu0
    %v107 = vadd.f32 %v84, %v106
    %108 = vdwg.mxu0
    %v109 = vrot.slane %v107, 4
    %v110 = vadd.f32 %v107, %v109
    %v111 = vrot.slane %v110, 2
    %v112 = vadd.f32 %v110, %v111
    %v113 = vrot.slane %v112, 1
    %v114 = vadd.f32 %v112, %v113
    %v115 = vmul.f32 %v107, %v107
    %v116 = vrot.slane %v115, 4
    %v117 = vadd.f32 %v115, %v116
    %v118 = vrot.slane %v117, 2
    %v119 = vadd.f32 %v117, %v118
    %v120 = vrot.slane %v119, 1
    %v121 = vadd.f32 %v119, %v120
    %v122 = vmul.f32 %v114, 0.125
    %v123 = vmul.f32 %v121, 0.125
    %v124 = vmul.f32 %v122, %v122
    %v125 = vsub.f32 %v123, %v124
    %v126 = vsub.f32 %v107, %v122
    %v127 = vadd.f32 %v125, 1e-05
    %v128 = vrsqrt.pop %v127
    %v129 = vmul.f32 %v128, %v127
    %v130 = vmul.f32 %v129, %v128
    %v131 = vmul.f32 0.5, %v130
    %v132 = vsub.f32 1.5, %v131
    %v133 = vmul.f32 %v128, %v132
    %vm134 = vweird.f32 %v127
    %vm135 = vweird.f32 %v128
    %vm136 = vmor %vm134, %vm135
    %v137 = vsel %vm136, %v128, %v133
    %v138 = vmul.f32 %v126, %v137
    %v139 = vld [vmem:[#allocation7 + $0x1] sm:$0x1]
    %v140 = vperm.slane %v139, 0
    %v141 = vmul.f32 %v138, %v140
    %v142 = vld [vmem:[#allocation7 + $0x2] sm:$0x1]
    %v143 = vperm.slane %v142, 0
    %v144 = vadd.f32 %v141, %v143
    %vm145 = vcmp.gt.f32.partialorder %v144, 0.0
    %v146 = vmul.f32 %v144, 0.1
    %v147 = vsel %vm145, %v144, %v146
    %v148 = vld [vmem:[#allocation6] sm:$0xff]
    %v149 = vld [vmem:[#allocation6 + $0x8] sm:$0xff]
    %v150 = vld [vmem:[#allocation6 + $0x10] sm:$0xff]
    %v151 = vld [vmem:[#allocation6 + $0x18] sm:$0xff]
    %v152 = vld [vmem:[#allocation6 + $0x20] sm:$0xff]
    %v153 = vld [vmem:[#allocation6 + $0x28] sm:$0xff]
    %v154 = vld [vmem:[#allocation6 + $0x30] sm:$0xff]
    %v155 = vld [vmem:[#allocation6 + $0x38] sm:$0xff]
    %v156 = vld [vmem:[#allocation6 + $0x40] sm:$0xff]
    %v157 = vld [vmem:[#allocation6 + $0x48] sm:$0xff]
    %v158 = vld [vmem:[#allocation6 + $0x50] sm:$0xff]
    %v159 = vld [vmem:[#allocation6 + $0x58] sm:$0xff]
    %v160 = vld [vmem:[#allocation6 + $0x60] sm:$0xff]
    %v161 = vld [vmem:[#allocation6 + $0x68] sm:$0xff]
    %v162 = vld [vmem:[#allocation6 + $0x70] sm:$0xff]
    %v163 = vld [vmem:[#allocation6 + $0x78] sm:$0xff]
    %v164 = vld [vmem:[#allocation7 + $0x3] sm:$0x1]
    %v165 = vperm.slane %v164, 0
    %166 = vmatpush.msra.mxu0 %v163
    %167 = vmatpush.msra.mxu0 %v162
    %168 = vmatpush.msra.mxu0 %v161
    %169 = vmatpush.msra.mxu0 %v160
    %170 = vmatpush.msra.mxu0 %v159
    %171 = vmatpush.msra.mxu0 %v158
    %172 = vmatpush.msra.mxu0 %v157
    %173 = vmatpush.msra.mxu0 %v156
    %174 = vmatpush.msra.mxu0 %v155
    %175 = vmatpush.msra.mxu0 %v154
    %176 = vmatpush.msra.mxu0 %v153
    %177 = vmatpush.msra.mxu0 %v152
    %178 = vmatpush.msra.mxu0 %v151
    %179 = vmatpush.msra.mxu0 %v150
    %180 = vmatpush.msra.mxu0 %v149
    %181 = vmatpush.msra.mxu0 %v148
    %182 = vmatmul.f32.gmra.mxu0 %v147
    %v183 = vpop.f32.mrf.mxu0
    %v184 = vadd.f32 %v165, %v183
    %185 = vdwg.mxu0
    %v186 = vrot.slane %v184, 4
    %v187 = vadd.f32 %v184, %v186
    %v188 = vrot.slane %v187, 2
    %v189 = vadd.f32 %v187, %v188
    %v190 = vrot.slane %v189, 1
    %v191 = vadd.f32 %v189, %v190
    %v192 = vmul.f32 %v184, %v184
    %v193 = vrot.slane %v192, 4
    %v194 = vadd.f32 %v192, %v193
    %v195 = vrot.slane %v194, 2
    %v196 = vadd.f32 %v194, %v195
    %v197 = vrot.slane %v196, 1
    %v198 = vadd.f32 %v196, %v197
    %v199 = vmul.f32 %v191, 0.125
    %v200 = vmul.f32 %v198, 0.125
    %v201 = vmul.f32 %v199, %v199
    %v202 = vsub.f32 %v200, %v201
    %v203 = vsub.f32 %v184, %v199
    %v204 = vadd.f32 %v202, 1e-05
    %v205 = vrsqrt.pop %v204
    %v206 = vmul.f32 %v205, %v204
    %v207 = vmul.f32 %v206, %v205
    %v208 = vmul.f32 0.5, %v207
    %v209 = vsub.f32 1.5, %v208
    %v210 = vmul.f32 %v205, %v209
    %vm211 = vweird.f32 %v204
    %vm212 = vweird.f32 %v205
    %vm213 = vmor %vm211, %vm212
    %v214 = vsel %vm213, %v205, %v210
    %v215 = vmul.f32 %v203, %v214
    %v216 = vld [vmem:[#allocation7 + $0x4] sm:$0x1]
    %v217 = vperm.slane %v216, 0
    %v218 = vmul.f32 %v215, %v217
    %v219 = vld [vmem:[#allocation7 + $0x5] sm:$0x1]
    %v220 = vperm.slane %v219, 0
    %v221 = vadd.f32 %v218, %v220
    %vm222 = vcmp.gt.f32.partialorder %v221, 0.0
    %v223 = vmul.f32 %v221, 0.1
    %v224 = vsel %vm222, %v221, %v223
    %v225 = vld [vmem:[#allocation6 + $0x80] sm:$0xff]
    %v226 = vld [vmem:[#allocation6 + $0x88] sm:$0xff]
    %v227 = vld [vmem:[#allocation6 + $0x90] sm:$0xff]
    %v228 = vld [vmem:[#allocation6 + $0x98] sm:$0xff]
    %v229 = vld [vmem:[#allocation6 + $0xa0] sm:$0xff]
    %v230 = vld [vmem:[#allocation6 + $0xa8] sm:$0xff]
    %v231 = vld [vmem:[#allocation6 + $0xb0] sm:$0xff]
    %v232 = vld [vmem:[#allocation6 + $0xb8] sm:$0xff]
    %v233 = vld [vmem:[#allocation6 + $0xc0] sm:$0xff]
    %v234 = vld [vmem:[#allocation6 + $0xc8] sm:$0xff]
    %v235 = vld [vmem:[#allocation6 + $0xd0] sm:$0xff]
    %v236 = vld [vmem:[#allocation6 + $0xd8] sm:$0xff]
    %v237 = vld [vmem:[#allocation6 + $0xe0] sm:$0xff]
    %v238 = vld [vmem:[#allocation6 + $0xe8] sm:$0xff]
    %v239 = vld [vmem:[#allocation6 + $0xf0] sm:$0xff]
    %v240 = vld [vmem:[#allocation6 + $0xf8] sm:$0xff]
    %v241 = vld [vmem:[#allocation7 + $0x6] sm:$0x1]
    %v242 = vperm.slane %v241, 0
    %243 = vmatpush.msra.mxu0 %v240
    %244 = vmatpush.msra.mxu0 %v239
    %245 = vmatpush.msra.mxu0 %v238
    %246 = vmatpush.msra.mxu0 %v237
    %247 = vmatpush.msra.mxu0 %v236
    %248 = vmatpush.msra.mxu0 %v235
    %249 = vmatpush.msra.mxu0 %v234
    %250 = vmatpush.msra.mxu0 %v233
    %251 = vmatpush.msra.mxu0 %v232
    %252 = vmatpush.msra.mxu0 %v231
    %253 = vmatpush.msra.mxu0 %v230
    %254 = vmatpush.msra.mxu0 %v229
    %255 = vmatpush.msra.mxu0 %v228
    %256 = vmatpush.msra.mxu0 %v227
    %257 = vmatpush.msra.mxu0 %v226
    %258 = vmatpush.msra.mxu0 %v225
    %259 = vmatmul.f32.gmra.mxu0 %v224
    %v260 = vpop.f32.mrf.mxu0
    %v261 = vadd.f32 %v242, %v260
    %262 = vdwg.mxu0
    %v263 = vrot.slane %v261, 4
    %v264 = vadd.f32 %v261, %v263
    %v265 = vrot.slane %v264, 2
    %v266 = vadd.f32 %v264, %v265
    %v267 = vrot.slane %v266, 1
    %v268 = vadd.f32 %v266, %v267
    %v269 = vmul.f32 %v261, %v261
    %v270 = vrot.slane %v269, 4
    %v271 = vadd.f32 %v269, %v270
    %v272 = vrot.slane %v271, 2
    %v273 = vadd.f32 %v271, %v272
    %v274 = vrot.slane %v273, 1
    %v275 = vadd.f32 %v273, %v274
    %v276 = vmul.f32 %v268, 0.125
    %v277 = vmul.f32 %v275, 0.125
    %v278 = vmul.f32 %v276, %v276
    %v279 = vsub.f32 %v277, %v278
    %v280 = vsub.f32 %v261, %v276
    %v281 = vadd.f32 %v279, 1e-05
    %v282 = vrsqrt.pop %v281
    %v283 = vmul.f32 %v282, %v281
    %v284 = vmul.f32 %v283, %v282
    %v285 = vmul.f32 0.5, %v284
    %v286 = vsub.f32 1.5, %v285
    %v287 = vmul.f32 %v282, %v286
    %vm288 = vweird.f32 %v281
    %vm289 = vweird.f32 %v282
    %vm290 = vmor %vm288, %vm289
    %v291 = vsel %vm290, %v282, %v287
    %v292 = vmul.f32 %v280, %v291
    %v293 = vld [vmem:[#allocation7 + $0x7] sm:$0x1]
    %v294 = vperm.slane %v293, 0
    %v295 = vmul.f32 %v292, %v294
    %v296 = vld [vmem:[#allocation7 + $0x8] sm:$0x1]
    %v297 = vperm.slane %v296, 0
    %v298 = vadd.f32 %v295, %v297
    %vm299 = vcmp.gt.f32.partialorder %v298, 0.0
    %v300 = vmul.f32 %v298, 0.1
    %v301 = vsel %vm299, %v298, %v300
    %v302 = vld [vmem:[#allocation7 + $0x9] sm:$0x1]
    %v303 = vld [vmem:[#allocation7 + $0xa] sm:$0x1]
    %v304 = vperm.slane %v302, 0
    %v305 = vmul.f32 %v301, %v304
    %306 = vadd.xlane.f32.xlu0 %v305
    %v307 = vpop.xlane.xlu0 %306
    %v308 = vperm.slane %v303, 0
    %v309 = vadd.f32 %v307, %v308
    %vm310 = vcmask 7168
    %311 = vst.msk [vmem:[%s4] sm:$0xff] %vm310, %v309
    // Predicated region
    $region34: #{tpu_custom_call.1} parent=1 // pred_check
      _
    $region35: #{tpu_custom_call.1} parent=1 // pred_check_branch
      %313 = sbr.rel (0) target = $region37
    $region36: #{tpu_custom_call.1} parent=1 // pred_region
      _
    $region37: #{tpu_custom_call.1} parent=1 // pred_fallthru
      _
    // Predicated region
    $region38: #{tpu_custom_call.1} parent=1 // pred_check
      _
    $region39: #{tpu_custom_call.1} parent=1 // pred_check_branch
      %315 = sbr.rel (0) target = $region41
    $region40: #{tpu_custom_call.1} parent=1 // pred_region
      _
    $region41: #{tpu_custom_call.1} parent=1 // pred_fallthru
      _
    %316 = vsyncpa [#allocation3], 1
    %317 = vsyncpa [#allocation5], 1
    %318 = vsyncpa [#allocation8], 1

</llo_original>
